<compile_context>
chip_gen: v5e
topology: v5e:2x2
jax: 0.10.0
libtpu: 0.0.40
codegen_flags: <defaults>
</compile_context>

<pallas_src>
import functools
import math

import jax
import jax.numpy as jnp
from jax.experimental import pallas as pl
from jax.experimental.pallas import tpu as pltpu


# ----------------------------------------------------------------------------
# Fused kernel: projections + multi-head attention + fc + residual + LayerNorm
# ----------------------------------------------------------------------------
def _mha_fused_kernel(q_ref, k_ref, v_ref, wq_ref, wk_ref, wv_ref, wfc_ref,
                      ln_ref, out_ref, *maybe_logit_ref,
                      n_head, d_k, d_v, d_model, bb, len_q, len_k,
                      inv_temperature, eps):
    logit_ref = maybe_logit_ref[0] if maybe_logit_ref else None

    # Raw inputs for this batch block, flattened to 2-D row slabs.
    q_raw = q_ref[...].reshape(bb * len_q, d_model)      # f32; also the residual
    k_raw = k_ref[...].reshape(bb * len_k, d_model)
    v_raw = v_ref[...].reshape(bb * len_k, d_model)

    q_bf = q_raw.astype(jnp.bfloat16)
    k_bf = k_raw.astype(jnp.bfloat16)
    v_bf = v_raw.astype(jnp.bfloat16)

    # Fused per-head projections (resident bf16 weights, f32 accumulation).
    # Heads are stacked along the ROW axis (cheap sublane concat) -> head-major
    # (n_head*bb, L, d) layout, so no lane slicing / lane concat is needed.
    qh, kh, vh = [], [], []
    for h in range(n_head):                               # n_head small & static
        qh.append(jnp.dot(q_bf, wq_ref[h], preferred_element_type=jnp.float32))
        kh.append(jnp.dot(k_bf, wk_ref[h], preferred_element_type=jnp.float32))
        vh.append(jnp.dot(v_bf, wv_ref[h], preferred_element_type=jnp.float32))

    hb = n_head * bb
    q_all = jnp.concatenate(qh, axis=0).reshape(hb, len_q, d_k)
    k_all = jnp.concatenate(kh, axis=0).reshape(hb, len_k, d_k)
    v_all = jnp.concatenate(vh, axis=0).reshape(hb, len_k, d_v)

    # All heads x batch rows in a single batched contraction (one MXU stream).
    logits = jnp.einsum("bqd,bkd->bqk",
                        q_all.astype(jnp.bfloat16), k_all.astype(jnp.bfloat16),
                        preferred_element_type=jnp.float32)   # (hb, lq, lk) f32

    if logit_ref is not None:
        # Un-scaled, matching the torch module's returned attn_logit.
        logit_ref[...] = logits.reshape(n_head, bb, len_q, len_k)

    # Softmax in f32 (v5e-safe); multiply by 1/temperature instead of divide.
    scaled = logits * inv_temperature
    m = jnp.max(scaled, axis=-1, keepdims=True)
    e = jnp.exp(scaled - m)
    denom = jnp.sum(e, axis=-1, keepdims=True)
    attn = e * pl.reciprocal(denom, approx=False)

    out_all = jnp.einsum("bqk,bkd->bqd",
                         attn.astype(jnp.bfloat16), v_all.astype(jnp.bfloat16),
                         preferred_element_type=jnp.float32)  # (hb, lq, d_v) f32

    # fc projection as a per-head accumulation (== concat(heads) @ W_fc),
    # plus fc bias + residual; dropout = identity (eval mode).
    y = q_raw + ln_ref[0:1, :]
    for h in range(n_head):
        oh = out_all[h * bb:(h + 1) * bb].reshape(bb * len_q, d_v)
        y = y + jnp.dot(oh.astype(jnp.bfloat16), wfc_ref[h],
                        preferred_element_type=jnp.float32)

    # LayerNorm over d_model (f32).
    mean = jnp.mean(y, axis=-1, keepdims=True)
    var = jnp.mean((y - mean) ** 2, axis=-1, keepdims=True)
    y_norm = (y - mean) * jax.lax.rsqrt(var + eps)
    out_ref[...] = y_norm * ln_ref[1:2, :] + ln_ref[2:3, :]


def mha_fused_pallas(q, k, v, w_q_heads, w_k_heads, w_v_heads, w_fc_heads,
                     ln_params, *, n_head, d_k, d_v, temperature, eps=1e-5,
                     batch_block=None, return_logits=True):
    """q/k/v: (B, L, d_model) f32 raw inputs.
    w_*_heads: (n_head, d_model, d) bf16; w_fc_heads: (n_head, d_v, d_model) bf16.
    ln_params: (3, d_model) f32 = [fc bias, ln gamma, ln beta]."""
    sz_b, len_q, d_model = q.shape
    _, len_k, _ = k.shape

    bb = sz_b if batch_block is None else batch_block
    assert sz_b % bb == 0, "batch must be divisible by batch_block"
    grid = (sz_b // bb,)

    kernel = functools.partial(
        _mha_fused_kernel, n_head=n_head, d_k=d_k, d_v=d_v, d_model=d_model,
        bb=bb, len_q=len_q, len_k=len_k,
        inv_temperature=float(1.0 / temperature), eps=float(eps))

    out_shape = [jax.ShapeDtypeStruct((sz_b * len_q, d_model), jnp.float32)]
    out_specs = [pl.BlockSpec((bb * len_q, d_model), lambda b: (b, 0))]
    if return_logits:
        out_shape.append(
            jax.ShapeDtypeStruct((n_head, sz_b, len_q, len_k), jnp.float32))
        out_specs.append(
            pl.BlockSpec((n_head, bb, len_q, len_k), lambda b: (0, b, 0, 0)))

    results = pl.pallas_call(
        kernel,
        out_shape=tuple(out_shape),
        grid_spec=pltpu.PrefetchScalarGridSpec(
            num_scalar_prefetch=0,
            grid=grid,
            in_specs=[
                pl.BlockSpec((bb, len_q, d_model), lambda b: (b, 0, 0)),
                pl.BlockSpec((bb, len_k, d_model), lambda b: (b, 0, 0)),
                pl.BlockSpec((bb, len_k, d_model), lambda b: (b, 0, 0)),
                # Constant index_map -> weights / params stay VMEM-resident.
                pl.BlockSpec((n_head, d_model, d_k), lambda b: (0, 0, 0)),
                pl.BlockSpec((n_head, d_model, d_k), lambda b: (0, 0, 0)),
                pl.BlockSpec((n_head, d_model, d_v), lambda b: (0, 0, 0)),
                pl.BlockSpec((n_head, d_v, d_model), lambda b: (0, 0, 0)),
                pl.BlockSpec((3, d_model), lambda b: (0, 0)),
            ],
            out_specs=tuple(out_specs),
        ),
        compiler_params=pltpu.CompilerParams(
            dimension_semantics=("parallel",)),
    )(q, k, v, w_q_heads, w_k_heads, w_v_heads, w_fc_heads, ln_params)

    if return_logits:
        out2d, logits = results
        return out2d, logits
    (out2d,) = results
    return out2d, None


# ----------------------------------------------------------------------------
# MultiHeadAttention wrapper (parameters + output reshape glue in plain JAX)
# ----------------------------------------------------------------------------
class MultiHeadAttentionPallas:
    def __init__(self, n_head, d_model, d_k, d_v, key):
        self.n_head, self.d_model, self.d_k, self.d_v = n_head, d_model, d_k, d_v
        self.temperature = float(d_k) ** 0.5

        k1, k2, k3, k4, k5 = jax.random.split(key, 5)
        std_qk = math.sqrt(2.0 / (d_model + d_k))
        std_v = math.sqrt(2.0 / (d_model + d_v))
        # torch Linear weights are (out_features, in_features)
        self.w_qs = std_qk * jax.random.normal(k1, (n_head * d_k, d_model), jnp.float32)
        self.w_ks = std_qk * jax.random.normal(k2, (n_head * d_k, d_model), jnp.float32)
        self.w_vs = std_v * jax.random.normal(k3, (n_head * d_v, d_model), jnp.float32)
        # fc: xavier_normal_ weight, default uniform bias init
        std_fc = math.sqrt(2.0 / (n_head * d_v + d_model))
        self.w_fc = std_fc * jax.random.normal(k4, (d_model, n_head * d_v), jnp.float32)
        bound = 1.0 / math.sqrt(n_head * d_v)
        self.b_fc = jax.random.uniform(k5, (d_model,), jnp.float32, -bound, bound)
        # LayerNorm params
        self.ln_gamma = jnp.ones((d_model,), jnp.float32)
        self.ln_beta = jnp.zeros((d_model,), jnp.float32)

        # Kernel-side layouts (built once): per-head pre-transposed bf16 weights
        # and the packed (bias, gamma, beta) param slab.
        self.w_q_heads = self.w_qs.reshape(n_head, d_k, d_model).transpose(0, 2, 1).astype(jnp.bfloat16)
        self.w_k_heads = self.w_ks.reshape(n_head, d_k, d_model).transpose(0, 2, 1).astype(jnp.bfloat16)
        self.w_v_heads = self.w_vs.reshape(n_head, d_v, d_model).transpose(0, 2, 1).astype(jnp.bfloat16)
        self.w_fc_heads = self.w_fc.T.reshape(n_head, d_v, d_model).astype(jnp.bfloat16)
        self.ln_params = jnp.stack([self.b_fc, self.ln_gamma, self.ln_beta], axis=0)

    def __call__(self, q, k, v):
        sz_b, len_q, _ = q.shape
        len_k = k.shape[1]

        out2d, logits = mha_fused_pallas(
            q, k, v, self.w_q_heads, self.w_k_heads, self.w_v_heads,
            self.w_fc_heads, self.ln_params,
            n_head=self.n_head, d_k=self.d_k, d_v=self.d_v,
            temperature=self.temperature)

        out = out2d.reshape(sz_b, len_q, self.d_model)
        # (n_head, b, lq, lk) -> (n_head*b, lq, lk): contiguous reshape (free),
        # matches torch's permute(2,0,1,3).view(-1, len_q, d_k) head-major order.
        attn_logit = logits.reshape(self.n_head * sz_b, len_q, len_k)
        return out, attn_logit


# ----------------------------------------------------------------------------
# Reference (plain JAX, numerics-matched: bf16 matmul inputs, f32 accumulation)
# ----------------------------------------------------------------------------
def reference_forward(mha, q, k, v):
    n_head, d_k, d_v = mha.n_head, mha.d_k, mha.d_v
    sz_b, len_q, d_model = q.shape
    len_k = k.shape[1]

    qb = q.astype(jnp.bfloat16)
    kb = k.astype(jnp.bfloat16)
    vb = v.astype(jnp.bfloat16)

    qp = jnp.einsum("bld,hdk->hblk", qb, mha.w_q_heads,
                    preferred_element_type=jnp.float32)
    kp = jnp.einsum("bld,hdk->hblk", kb, mha.w_k_heads,
                    preferred_element_type=jnp.float32)
    vp = jnp.einsum("bld,hdk->hblk", vb, mha.w_v_heads,
                    preferred_element_type=jnp.float32)

    logits = jnp.einsum("hbqd,hbkd->hbqk",
                        qp.astype(jnp.bfloat16), kp.astype(jnp.bfloat16),
                        preferred_element_type=jnp.float32)
    scaled = logits / mha.temperature
    m = jnp.max(scaled, axis=-1, keepdims=True)
    e = jnp.exp(scaled - m)
    attn = e / jnp.sum(e, axis=-1, keepdims=True)

    out = jnp.einsum("hbqk,hbkd->hbqd",
                     attn.astype(jnp.bfloat16), vp.astype(jnp.bfloat16),
                     preferred_element_type=jnp.float32)
    y = jnp.einsum("hbqd,hdm->bqm", out.astype(jnp.bfloat16), mha.w_fc_heads,
                   preferred_element_type=jnp.float32)
    y = y + mha.b_fc + q

    mean = jnp.mean(y, axis=-1, keepdims=True)
    var = jnp.mean((y - mean) ** 2, axis=-1, keepdims=True)
    yn = (y - mean) / jnp.sqrt(var + 1e-5)
    out_final = yn * mha.ln_gamma + mha.ln_beta
    return out_final, logits.reshape(n_head * sz_b, len_q, len_k)


if __name__ == "__main__":
    key = jax.random.PRNGKey(0)
    k_params, k_q, k_k, k_v = jax.random.split(key, 4)

    # small shapes consistent with the module's forward
    n_head, d_model, d_k, d_v = 2, 32, 16, 16
    batch, seq = 2, 8

    mha = MultiHeadAttentionPallas(n_head, d_model, d_k, d_v, k_params)

    q = jax.random.normal(k_q, (batch, seq, d_model), jnp.float32)
    k = jax.random.normal(k_k, (batch, seq, d_model), jnp.float32)
    v = jax.random.normal(k_v, (batch, seq, d_model), jnp.float32)

    out, attn_logit = mha(q, k, v)
    out = jax.block_until_ready(out)
    attn_logit = jax.block_until_ready(attn_logit)

    ref_out, ref_logit = reference_forward(mha, q, k, v)
    assert out.shape == (batch, seq, d_model)
    assert attn_logit.shape == (n_head * batch, seq, seq)
    # bf16 MXU inputs with f32 accumulation in both kernel and reference:
    # differences are accumulation-order only, so keep modest tolerances.
    assert jnp.allclose(attn_logit, ref_logit, atol=5e-3, rtol=5e-3)
    assert jnp.allclose(out, ref_out, atol=2e-2, rtol=2e-2)

    print("KERNEL_OK")
</pallas_src>

<mosaic_0001>
module attributes {stable_mosaic.version = 11 : i64} {
  func.func @_mha_fused_kernel(%arg0: i32, %arg1: memref<2x8x32xf32, #tpu.memory_space<vmem>>, %arg2: memref<2x8x32xf32, #tpu.memory_space<vmem>>, %arg3: memref<2x8x32xf32, #tpu.memory_space<vmem>>, %arg4: memref<2x32x16xbf16, #tpu.memory_space<vmem>>, %arg5: memref<2x32x16xbf16, #tpu.memory_space<vmem>>, %arg6: memref<2x32x16xbf16, #tpu.memory_space<vmem>>, %arg7: memref<2x16x32xbf16, #tpu.memory_space<vmem>>, %arg8: memref<3x32xf32, #tpu.memory_space<vmem>>, %arg9: memref<16x32xf32, #tpu.memory_space<vmem>>, %arg10: memref<2x2x8x8xf32, #tpu.memory_space<vmem>>) attributes {dimension_semantics = [#tpu.dimension_semantics<parallel>], iteration_bounds = array<i64: 1>, scalar_prefetch = 0 : i64, scratch_operands = 0 : i64, tpu.core_type = #tpu.core_type<tc>, window_params = [{transform_indices = @transform_0, window_bounds = array<i64: 2, 8, 32>}, {transform_indices = @transform_1, window_bounds = array<i64: 2, 8, 32>}, {transform_indices = @transform_2, window_bounds = array<i64: 2, 8, 32>}, {pipeline_mode = #tpu.pipeline_mode<synchronous>, transform_indices = @transform_3, window_bounds = array<i64: 2, 32, 16>}, {pipeline_mode = #tpu.pipeline_mode<synchronous>, transform_indices = @transform_4, window_bounds = array<i64: 2, 32, 16>}, {pipeline_mode = #tpu.pipeline_mode<synchronous>, transform_indices = @transform_5, window_bounds = array<i64: 2, 32, 16>}, {pipeline_mode = #tpu.pipeline_mode<synchronous>, transform_indices = @transform_6, window_bounds = array<i64: 2, 16, 32>}, {pipeline_mode = #tpu.pipeline_mode<synchronous>, transform_indices = @transform_7, window_bounds = array<i64: 3, 32>}, {transform_indices = @transform_8, window_bounds = array<i64: 16, 32>}, {transform_indices = @transform_9, window_bounds = array<i64: 2, 2, 8, 8>}]} {
    %c0 = arith.constant 0 : index
    %c0_0 = arith.constant 0 : index
    %c0_1 = arith.constant 0 : index
    %0 = vector.load %arg1[%c0, %c0_0, %c0_1] : memref<2x8x32xf32, #tpu.memory_space<vmem>>, vector<2x8x32xf32>
    %1 = vector.shape_cast %0 : vector<2x8x32xf32> to vector<16x32xf32>
    %c0_2 = arith.constant 0 : index
    %c0_3 = arith.constant 0 : index
    %c0_4 = arith.constant 0 : index
    %2 = vector.load %arg2[%c0_2, %c0_3, %c0_4] : memref<2x8x32xf32, #tpu.memory_space<vmem>>, vector<2x8x32xf32>
    %3 = vector.shape_cast %2 : vector<2x8x32xf32> to vector<16x32xf32>
    %c0_5 = arith.constant 0 : index
    %c0_6 = arith.constant 0 : index
    %c0_7 = arith.constant 0 : index
    %4 = vector.load %arg3[%c0_5, %c0_6, %c0_7] : memref<2x8x32xf32, #tpu.memory_space<vmem>>, vector<2x8x32xf32>
    %5 = vector.shape_cast %4 : vector<2x8x32xf32> to vector<16x32xf32>
    %6 = arith.truncf %1 : vector<16x32xf32> to vector<16x32xbf16>
    %7 = arith.truncf %3 : vector<16x32xf32> to vector<16x32xbf16>
    %8 = arith.truncf %5 : vector<16x32xf32> to vector<16x32xbf16>
    %c0_8 = arith.constant 0 : index
    %c0_9 = arith.constant 0 : index
    %c0_10 = arith.constant 0 : index
    %9 = vector.load %arg4[%c0_8, %c0_9, %c0_10] : memref<2x32x16xbf16, #tpu.memory_space<vmem>>, vector<1x32x16xbf16>
    %10 = vector.shape_cast %9 : vector<1x32x16xbf16> to vector<32x16xbf16>
    %cst = arith.constant dense<0.000000e+00> : vector<16x16xf32>
    %11 = tpu.matmul %6, %10, %cst {dimension_numbers = #tpu.dot_dimension_numbers<[1], [0], [0], [1], [0, 0, 1, 1], [], []>} : vector<16x32xbf16>, vector<32x16xbf16>, vector<16x16xf32> -> vector<16x16xf32>
    %c0_11 = arith.constant 0 : index
    %c0_12 = arith.constant 0 : index
    %c0_13 = arith.constant 0 : index
    %12 = vector.load %arg5[%c0_11, %c0_12, %c0_13] : memref<2x32x16xbf16, #tpu.memory_space<vmem>>, vector<1x32x16xbf16>
    %13 = vector.shape_cast %12 : vector<1x32x16xbf16> to vector<32x16xbf16>
    %cst_14 = arith.constant dense<0.000000e+00> : vector<16x16xf32>
    %14 = tpu.matmul %7, %13, %cst_14 {dimension_numbers = #tpu.dot_dimension_numbers<[1], [0], [0], [1], [0, 0, 1, 1], [], []>} : vector<16x32xbf16>, vector<32x16xbf16>, vector<16x16xf32> -> vector<16x16xf32>
    %c0_15 = arith.constant 0 : index
    %c0_16 = arith.constant 0 : index
    %c0_17 = arith.constant 0 : index
    %15 = vector.load %arg6[%c0_15, %c0_16, %c0_17] : memref<2x32x16xbf16, #tpu.memory_space<vmem>>, vector<1x32x16xbf16>
    %16 = vector.shape_cast %15 : vector<1x32x16xbf16> to vector<32x16xbf16>
    %cst_18 = arith.constant dense<0.000000e+00> : vector<16x16xf32>
    %17 = tpu.matmul %8, %16, %cst_18 {dimension_numbers = #tpu.dot_dimension_numbers<[1], [0], [0], [1], [0, 0, 1, 1], [], []>} : vector<16x32xbf16>, vector<32x16xbf16>, vector<16x16xf32> -> vector<16x16xf32>
    %c1 = arith.constant 1 : index
    %c0_19 = arith.constant 0 : index
    %c0_20 = arith.constant 0 : index
    %18 = vector.load %arg4[%c1, %c0_19, %c0_20] : memref<2x32x16xbf16, #tpu.memory_space<vmem>>, vector<1x32x16xbf16>
    %19 = vector.shape_cast %18 : vector<1x32x16xbf16> to vector<32x16xbf16>
    %cst_21 = arith.constant dense<0.000000e+00> : vector<16x16xf32>
    %20 = tpu.matmul %6, %19, %cst_21 {dimension_numbers = #tpu.dot_dimension_numbers<[1], [0], [0], [1], [0, 0, 1, 1], [], []>} : vector<16x32xbf16>, vector<32x16xbf16>, vector<16x16xf32> -> vector<16x16xf32>
    %c1_22 = arith.constant 1 : index
    %c0_23 = arith.constant 0 : index
    %c0_24 = arith.constant 0 : index
    %21 = vector.load %arg5[%c1_22, %c0_23, %c0_24] : memref<2x32x16xbf16, #tpu.memory_space<vmem>>, vector<1x32x16xbf16>
    %22 = vector.shape_cast %21 : vector<1x32x16xbf16> to vector<32x16xbf16>
    %cst_25 = arith.constant dense<0.000000e+00> : vector<16x16xf32>
    %23 = tpu.matmul %7, %22, %cst_25 {dimension_numbers = #tpu.dot_dimension_numbers<[1], [0], [0], [1], [0, 0, 1, 1], [], []>} : vector<16x32xbf16>, vector<32x16xbf16>, vector<16x16xf32> -> vector<16x16xf32>
    %c1_26 = arith.constant 1 : index
    %c0_27 = arith.constant 0 : index
    %c0_28 = arith.constant 0 : index
    %24 = vector.load %arg6[%c1_26, %c0_27, %c0_28] : memref<2x32x16xbf16, #tpu.memory_space<vmem>>, vector<1x32x16xbf16>
    %25 = vector.shape_cast %24 : vector<1x32x16xbf16> to vector<32x16xbf16>
    %cst_29 = arith.constant dense<0.000000e+00> : vector<16x16xf32>
    %26 = tpu.matmul %8, %25, %cst_29 {dimension_numbers = #tpu.dot_dimension_numbers<[1], [0], [0], [1], [0, 0, 1, 1], [], []>} : vector<16x32xbf16>, vector<32x16xbf16>, vector<16x16xf32> -> vector<16x16xf32>
    %27 = tpu.concatenate %11, %20 in 0 : vector<16x16xf32>, vector<16x16xf32> -> vector<32x16xf32>
    %28 = vector.shape_cast %27 : vector<32x16xf32> to vector<4x8x16xf32>
    %29 = tpu.concatenate %14, %23 in 0 : vector<16x16xf32>, vector<16x16xf32> -> vector<32x16xf32>
    %30 = vector.shape_cast %29 : vector<32x16xf32> to vector<4x8x16xf32>
    %31 = tpu.concatenate %17, %26 in 0 : vector<16x16xf32>, vector<16x16xf32> -> vector<32x16xf32>
    %32 = vector.shape_cast %31 : vector<32x16xf32> to vector<4x8x16xf32>
    %33 = arith.truncf %28 : vector<4x8x16xf32> to vector<4x8x16xbf16>
    %34 = arith.truncf %30 : vector<4x8x16xf32> to vector<4x8x16xbf16>
    "tpu.trace_start"() <{level = 10 : i32, message = "bqd,bkd->bqk"}> : () -> ()
    %cst_30 = arith.constant dense<0.000000e+00> : vector<4x8x8xf32>
    %35 = tpu.matmul %33, %34, %cst_30 {dimension_numbers = #tpu.dot_dimension_numbers<[2], [2], [1], [1], [0, 0, 0, 1, 1, 1], [0], [0]>} : vector<4x8x16xbf16>, vector<4x8x16xbf16>, vector<4x8x8xf32> -> vector<4x8x8xf32>
    "tpu.trace_stop"() : () -> ()
    %36 = vector.shape_cast %35 : vector<4x8x8xf32> to vector<2x2x8x8xf32>
    %c0_31 = arith.constant 0 : index
    %c0_32 = arith.constant 0 : index
    %c0_33 = arith.constant 0 : index
    %c0_34 = arith.constant 0 : index
    %37 = vector.load %arg10[%c0_31, %c0_32, %c0_33, %c0_34] : memref<2x2x8x8xf32, #tpu.memory_space<vmem>>, vector<2x2x8x8xf32>
    tpu.vector_store %arg10[%c0_31, %c0_32, %c0_33, %c0_34], %36 {strides = array<i32>} : memref<2x2x8x8xf32, #tpu.memory_space<vmem>>, vector<2x2x8x8xf32>,
    %cst_35 = arith.constant 2.500000e-01 : f32
    %38 = vector.broadcast %cst_35 : f32 to vector<4x8x8xf32>
    %39 = arith.mulf %35, %38 : vector<4x8x8xf32>
    %cst_36 = arith.constant dense<0xFF800000> : vector<4x8xf32>
    %40 = vector.multi_reduction <maximumf>, %39, %cst_36 [2] : vector<4x8x8xf32> to vector<4x8xf32>
    %41 = vector.shape_cast %40 : vector<4x8xf32> to vector<4x8x1xf32>
    %42 = vector.broadcast %41 : vector<4x8x1xf32> to vector<4x8x8xf32>
    %43 = arith.subf %39, %42 : vector<4x8x8xf32>
    %44 = math.exp %43 : vector<4x8x8xf32>
    %cst_37 = arith.constant dense<0.000000e+00> : vector<4x8xf32>
    %45 = vector.multi_reduction <add>, %44, %cst_37 [2] : vector<4x8x8xf32> to vector<4x8xf32>
    %46 = vector.shape_cast %45 : vector<4x8xf32> to vector<4x8x1xf32>
    %47 = tpu.reciprocal %46 : vector<4x8x1xf32> -> vector<4x8x1xf32>
    %48 = vector.broadcast %47 : vector<4x8x1xf32> to vector<4x8x8xf32>
    %49 = arith.mulf %44, %48 : vector<4x8x8xf32>
    %50 = arith.truncf %49 : vector<4x8x8xf32> to vector<4x8x8xbf16>
    %51 = arith.truncf %32 : vector<4x8x16xf32> to vector<4x8x16xbf16>
    "tpu.trace_start"() <{level = 10 : i32, message = "bqk,bkd->bqd"}> : () -> ()
    %cst_38 = arith.constant dense<0.000000e+00> : vector<4x8x16xf32>
    %52 = tpu.matmul %50, %51, %cst_38 {dimension_numbers = #tpu.dot_dimension_numbers<[2], [1], [1], [2], [0, 0, 0, 1, 1, 2], [0], [0]>} : vector<4x8x8xbf16>, vector<4x8x16xbf16>, vector<4x8x16xf32> -> vector<4x8x16xf32>
    "tpu.trace_stop"() : () -> ()
    %c0_39 = arith.constant 0 : index
    %c0_40 = arith.constant 0 : index
    %53 = vector.load %arg8[%c0_39, %c0_40] : memref<3x32xf32, #tpu.memory_space<vmem>>, vector<1x32xf32>
    %54 = vector.broadcast %53 : vector<1x32xf32> to vector<16x32xf32>
    %55 = arith.addf %1, %54 : vector<16x32xf32>
    %56 = vector.extract_strided_slice %52 {offsets = [0, 0, 0], sizes = [2, 8, 16], strides = [1, 1, 1]} : vector<4x8x16xf32> to vector<2x8x16xf32>
    %57 = vector.shape_cast %56 : vector<2x8x16xf32> to vector<16x16xf32>
    %58 = arith.truncf %57 : vector<16x16xf32> to vector<16x16xbf16>
    %c0_41 = arith.constant 0 : index
    %c0_42 = arith.constant 0 : index
    %c0_43 = arith.constant 0 : index
    %59 = vector.load %arg7[%c0_41, %c0_42, %c0_43] : memref<2x16x32xbf16, #tpu.memory_space<vmem>>, vector<1x16x32xbf16>
    %60 = vector.shape_cast %59 : vector<1x16x32xbf16> to vector<16x32xbf16>
    %cst_44 = arith.constant dense<0.000000e+00> : vector<16x32xf32>
    %61 = tpu.matmul %58, %60, %cst_44 {dimension_numbers = #tpu.dot_dimension_numbers<[1], [0], [0], [1], [0, 0, 1, 1], [], []>} : vector<16x16xbf16>, vector<16x32xbf16>, vector<16x32xf32> -> vector<16x32xf32>
    %62 = arith.addf %55, %61 : vector<16x32xf32>
    %63 = vector.extract_strided_slice %52 {offsets = [2, 0, 0], sizes = [2, 8, 16], strides = [1, 1, 1]} : vector<4x8x16xf32> to vector<2x8x16xf32>
    %64 = vector.shape_cast %63 : vector<2x8x16xf32> to vector<16x16xf32>
    %65 = arith.truncf %64 : vector<16x16xf32> to vector<16x16xbf16>
    %c1_45 = arith.constant 1 : index
    %c0_46 = arith.constant 0 : index
    %c0_47 = arith.constant 0 : index
    %66 = vector.load %arg7[%c1_45, %c0_46, %c0_47] : memref<2x16x32xbf16, #tpu.memory_space<vmem>>, vector<1x16x32xbf16>
    %67 = vector.shape_cast %66 : vector<1x16x32xbf16> to vector<16x32xbf16>
    %cst_48 = arith.constant dense<0.000000e+00> : vector<16x32xf32>
    %68 = tpu.matmul %65, %67, %cst_48 {dimension_numbers = #tpu.dot_dimension_numbers<[1], [0], [0], [1], [0, 0, 1, 1], [], []>} : vector<16x16xbf16>, vector<16x32xbf16>, vector<16x32xf32> -> vector<16x32xf32>
    %69 = arith.addf %62, %68 : vector<16x32xf32>
    %cst_49 = arith.constant dense<0.000000e+00> : vector<16xf32>
    %70 = vector.multi_reduction <add>, %69, %cst_49 [1] : vector<16x32xf32> to vector<16xf32>
    %71 = vector.shape_cast %70 : vector<16xf32> to vector<16x1xf32>
    %cst_50 = arith.constant 3.200000e+01 : f32
    %72 = vector.broadcast %cst_50 : f32 to vector<16x1xf32>
    %73 = arith.divf %71, %72 : vector<16x1xf32>
    %74 = vector.broadcast %73 : vector<16x1xf32> to vector<16x32xf32>
    %75 = arith.subf %69, %74 : vector<16x32xf32>
    %76 = arith.mulf %75, %75 : vector<16x32xf32>
    %cst_51 = arith.constant dense<0.000000e+00> : vector<16xf32>
    %77 = vector.multi_reduction <add>, %76, %cst_51 [1] : vector<16x32xf32> to vector<16xf32>
    %78 = vector.shape_cast %77 : vector<16xf32> to vector<16x1xf32>
    %cst_52 = arith.constant 3.200000e+01 : f32
    %79 = vector.broadcast %cst_52 : f32 to vector<16x1xf32>
    %80 = arith.divf %78, %79 : vector<16x1xf32>
    %81 = vector.broadcast %73 : vector<16x1xf32> to vector<16x32xf32>
    %82 = arith.subf %69, %81 : vector<16x32xf32>
    %cst_53 = arith.constant 9.99999974E-6 : f32
    %83 = vector.broadcast %cst_53 : f32 to vector<16x1xf32>
    %84 = arith.addf %80, %83 : vector<16x1xf32>
    %85 = math.rsqrt %84 : vector<16x1xf32>
    %86 = vector.broadcast %85 : vector<16x1xf32> to vector<16x32xf32>
    %87 = arith.mulf %82, %86 : vector<16x32xf32>
    %c1_54 = arith.constant 1 : index
    %c0_55 = arith.constant 0 : index
    %88 = vector.load %arg8[%c1_54, %c0_55] : memref<3x32xf32, #tpu.memory_space<vmem>>, vector<1x32xf32>
    %89 = vector.broadcast %88 : vector<1x32xf32> to vector<16x32xf32>
    %90 = arith.mulf %87, %89 : vector<16x32xf32>
    %c2 = arith.constant 2 : index
    %c0_56 = arith.constant 0 : index
    %91 = vector.load %arg8[%c2, %c0_56] : memref<3x32xf32, #tpu.memory_space<vmem>>, vector<1x32xf32>
    %92 = vector.broadcast %91 : vector<1x32xf32> to vector<16x32xf32>
    %93 = arith.addf %90, %92 : vector<16x32xf32>
    %c0_57 = arith.constant 0 : index
    %c0_58 = arith.constant 0 : index
    %94 = vector.load %arg9[%c0_57, %c0_58] : memref<16x32xf32, #tpu.memory_space<vmem>>, vector<16x32xf32>
    tpu.vector_store %arg9[%c0_57, %c0_58], %93 {strides = array<i32>} : memref<16x32xf32, #tpu.memory_space<vmem>>, vector<16x32xf32>,
    return
  }
  func.func @transform_0(%arg0: i32) -> (i32, i32, i32) {
    %c0_i32 = arith.constant 0 : i32
    %c0_i32_0 = arith.constant 0 : i32
    %c0_i32_1 = arith.constant 0 : i32
    return %arg0, %c0_i32, %c0_i32_0 : i32, i32, i32
  }
  func.func @transform_1(%arg0: i32) -> (i32, i32, i32) {
    %c0_i32 = arith.constant 0 : i32
    %c0_i32_0 = arith.constant 0 : i32
    %c0_i32_1 = arith.constant 0 : i32
    return %arg0, %c0_i32, %c0_i32_0 : i32, i32, i32
  }
  func.func @transform_2(%arg0: i32) -> (i32, i32, i32) {
    %c0_i32 = arith.constant 0 : i32
    %c0_i32_0 = arith.constant 0 : i32
    %c0_i32_1 = arith.constant 0 : i32
    return %arg0, %c0_i32, %c0_i32_0 : i32, i32, i32
  }
  func.func @transform_3(%arg0: i32) -> (i32, i32, i32) {
    %c0_i32 = arith.constant 0 : i32
    %c0_i32_0 = arith.constant 0 : i32
    %c0_i32_1 = arith.constant 0 : i32
    %c0_i32_2 = arith.constant 0 : i32
    return %c0_i32, %c0_i32_0, %c0_i32_1 : i32, i32, i32
  }
  func.func @transform_4(%arg0: i32) -> (i32, i32, i32) {
    %c0_i32 = arith.constant 0 : i32
    %c0_i32_0 = arith.constant 0 : i32
    %c0_i32_1 = arith.constant 0 : i32
    %c0_i32_2 = arith.constant 0 : i32
    return %c0_i32, %c0_i32_0, %c0_i32_1 : i32, i32, i32
  }
  func.func @transform_5(%arg0: i32) -> (i32, i32, i32) {
    %c0_i32 = arith.constant 0 : i32
    %c0_i32_0 = arith.constant 0 : i32
    %c0_i32_1 = arith.constant 0 : i32
    %c0_i32_2 = arith.constant 0 : i32
    return %c0_i32, %c0_i32_0, %c0_i32_1 : i32, i32, i32
  }
  func.func @transform_6(%arg0: i32) -> (i32, i32, i32) {
    %c0_i32 = arith.constant 0 : i32
    %c0_i32_0 = arith.constant 0 : i32
    %c0_i32_1 = arith.constant 0 : i32
    %c0_i32_2 = arith.constant 0 : i32
    return %c0_i32, %c0_i32_0, %c0_i32_1 : i32, i32, i32
  }
  func.func @transform_7(%arg0: i32) -> (i32, i32) {
    %c0_i32 = arith.constant 0 : i32
    %c0_i32_0 = arith.constant 0 : i32
    %c0_i32_1 = arith.constant 0 : i32
    return %c0_i32, %c0_i32_0 : i32, i32
  }
  func.func @transform_8(%arg0: i32) -> (i32, i32) {
    %c0_i32 = arith.constant 0 : i32
    %c0_i32_0 = arith.constant 0 : i32
    return %arg0, %c0_i32 : i32, i32
  }
  func.func @transform_9(%arg0: i32) -> (i32, i32, i32, i32) {
    %c0_i32 = arith.constant 0 : i32
    %c0_i32_0 = arith.constant 0 : i32
    %c0_i32_1 = arith.constant 0 : i32
    %c0_i32_2 = arith.constant 0 : i32
    return %c0_i32, %arg0, %c0_i32_0, %c0_i32_1 : i32, i32, i32, i32
  }
}

</mosaic_0001>

<llo_original>
// kernel: tpu_custom_call.1
$region0: #{tpu_custom_call.1}
  #allocation0 [shape = 'u32[]', space=smem, size = 0x4, offset = 0x4, fixed_abs, tag = 'smem constant byte address 0x4 - core index']
  #allocation1 [shape = 'u32[72,128]{1,0:T(1,128)}', space=vmem, size = 0x9000, scoped, tag = 'internal scratch']
  %s0 = inlined_call_operand.vmem [shape: f32[2,8,32], index: 0, kind: input, shape index: {}]
  %s1 = inlined_call_operand.vmem [shape: f32[2,8,32], index: 1, kind: input, shape index: {}]
  %s2 = inlined_call_operand.vmem [shape: f32[2,8,32], index: 2, kind: input, shape index: {}]
  %s3 = inlined_call_operand.vmem [shape: bf16[2,32,16], index: 3, kind: input, shape index: {}]
  %s4 = inlined_call_operand.vmem [shape: bf16[2,32,16], index: 4, kind: input, shape index: {}]
  %s5 = inlined_call_operand.vmem [shape: bf16[2,32,16], index: 5, kind: input, shape index: {}]
  %s6 = inlined_call_operand.vmem [shape: bf16[2,16,32], index: 6, kind: input, shape index: {}]
  %s7 = inlined_call_operand.vmem [shape: f32[3,32], index: 7, kind: input, shape index: {}]
  %s8 = inlined_call_operand.hbm [shape: f32[16,32], index: 8, kind: output, shape index: {0}]
  %s9 = inlined_call_operand.hbm [shape: f32[2,2,8,8], index: 9, kind: output, shape index: {1}]
  %10 = xla_tuple %s8, %s9
  %s11 = sld [smem:[#allocation0]]
  $region50: #{tpu_custom_call.1} parent=0
    _
  %s13 = ssub.s32 1, %s11
  %s14 = scalar_select 0, %s13, %s11
  $region1: #{tpu_custom_call.1} parent=0
    #allocation2 [shape = 'u8[8192]{0}', space=vmem, size = 0x2000, scoped, tag = 'output window, operand 0, single buffered']
    #allocation3 [shape = 's32[1]{0}', space=sflag, size = 0x4, scoped, tag = 'scoped memory for tpu_custom_call.1']
    #allocation4 [shape = 'u8[16384]{0}', space=vmem, size = 0x4000, scoped, tag = 'output window, operand 1, single buffered']
    #allocation5 [shape = 's32[1]{0}', space=sflag, size = 0x4, scoped, tag = 'scoped memory for tpu_custom_call.1']
    %15 = vsyncpa [#allocation3], 0
    %16 = vsyncpa [#allocation5], 0
    // Predicated region
    $region2: #{tpu_custom_call.1} parent=1 // pred_check
      _
    $region3: #{tpu_custom_call.1} parent=1 // pred_check_branch
      %18 = sbr.rel (0) target = $region5
    $region4: #{tpu_custom_call.1} parent=1 // pred_region
      _
    $region5: #{tpu_custom_call.1} parent=1 // pred_fallthru
      _
    // Predicated region
    $region6: #{tpu_custom_call.1} parent=1 // pred_check
      _
    $region7: #{tpu_custom_call.1} parent=1 // pred_check_branch
      %20 = sbr.rel (0) target = $region9
    $region8: #{tpu_custom_call.1} parent=1 // pred_region
      _
    $region9: #{tpu_custom_call.1} parent=1 // pred_fallthru
      _
    // Predicated region
    $region10: #{tpu_custom_call.1} parent=1 // pred_check
      _
    $region11: #{tpu_custom_call.1} parent=1 // pred_check_branch
      %22 = sbr.rel (0) target = $region13
    $region12: #{tpu_custom_call.1} parent=1 // pred_region
      _
    $region13: #{tpu_custom_call.1} parent=1 // pred_fallthru
      _
    // Predicated region
    $region14: #{tpu_custom_call.1} parent=1 // pred_check
      _
    $region15: #{tpu_custom_call.1} parent=1 // pred_check_branch
      %24 = sbr.rel (0) target = $region17
    $region16: #{tpu_custom_call.1} parent=1 // pred_region
      _
    $region17: #{tpu_custom_call.1} parent=1 // pred_fallthru
      _
    // Predicated region
    $region18: #{tpu_custom_call.1} parent=1 // pred_check
      _
    $region19: #{tpu_custom_call.1} parent=1 // pred_check_branch
      %26 = sbr.rel (0) target = $region21
    $region20: #{tpu_custom_call.1} parent=1 // pred_region
      _
    $region21: #{tpu_custom_call.1} parent=1 // pred_fallthru
      _
    // Predicated region
    $region22: #{tpu_custom_call.1} parent=1 // pred_check
      _
    $region23: #{tpu_custom_call.1} parent=1 // pred_check_branch
      %28 = sbr.rel (0) target = $region25
    $region24: #{tpu_custom_call.1} parent=1 // pred_region
      _
    $region25: #{tpu_custom_call.1} parent=1 // pred_fallthru
      _
    // Predicated region
    $region26: #{tpu_custom_call.1} parent=1 // pred_check
      _
    $region27: #{tpu_custom_call.1} parent=1 // pred_check_branch
      %30 = sbr.rel (0) target = $region29
    $region28: #{tpu_custom_call.1} parent=1 // pred_region
      _
    $region29: #{tpu_custom_call.1} parent=1 // pred_fallthru
      _
    // Predicated region
    $region30: #{tpu_custom_call.1} parent=1 // pred_check
      _
    $region31: #{tpu_custom_call.1} parent=1 // pred_check_branch
      %32 = sbr.rel (0) target = $region33
    $region32: #{tpu_custom_call.1} parent=1 // pred_region
      _
    $region33: #{tpu_custom_call.1} parent=1 // pred_fallthru
      _
    %v34 = vld [vmem:[%s0] sm:$0xff]
    %v35 = vld [vmem:[%s0 + $0x8] sm:$0xff]
    %v36 = vld [vmem:[%s1] sm:$0xff]
    %v37 = vld [vmem:[%s1 + $0x8] sm:$0xff]
    %v38 = vld [vmem:[%s2] sm:$0xff]
    %v39 = vld [vmem:[%s2 + $0x8] sm:$0xff]
    %v40 = vpack.c.bf16 %v35, %v34
    %v41 = vpack.c.bf16 %v37, %v36
    %v42 = vpack.c.bf16 %v39, %v38
    %v43 = vld [vmem:[%s3] sm:$0xf]
    %v44 = vld [vmem:[%s3 + $0x4] sm:$0xf]
    %v45 = vld [vmem:[%s3 + $0x8] sm:$0xf]
    %v46 = vld [vmem:[%s3 + $0xc] sm:$0xf]
    %v51 = vunpack.c.l.b16 %v43
    %v52 = vunpack.c.l.b16 %v44
    %v53 = vunpack.c.l.b16 %v45
    %v54 = vunpack.c.l.b16 %v46
    %v55 = vpack.c.b16 %v52, %v51
    %v56 = vpack.c.b16 %v54, %v53
    %vm59 = vcmask 261120
    %v61 = vsel %vm59, %v40, 0
    %63 = vmatpush.bf16.msra.mxu0 0
    %64 = vmatpush.bf16.msra.mxu0 0
    %65 = vmatpush.bf16.msra.mxu0 0
    %66 = vmatpush.bf16.msra.mxu0 0
    %67 = vmatpush.bf16.msra.mxu0 0
    %68 = vmatpush.bf16.msra.mxu0 0
    %69 = vmatpush.bf16.msra.mxu0 %v56
    %70 = vmatpush.bf16.msra.mxu0 %v55
    %71 = vmatmul.bf16.gmra.mxu0 %v61
    %v72 = vpop.f32.mrf.mxu0
    %v73 = vadd.f32 0.0, %v72
    %v74 = vpop.f32.mrf.mxu0
    %v75 = vadd.f32 0.0, %v74
    %76 = vdwg.mxu0
    %v77 = vld [vmem:[%s4] sm:$0xf]
    %v78 = vld [vmem:[%s4 + $0x4] sm:$0xf]
    %v79 = vld [vmem:[%s4 + $0x8] sm:$0xf]
    %v80 = vld [vmem:[%s4 + $0xc] sm:$0xf]
    %v85 = vunpack.c.l.b16 %v77
    %v86 = vunpack.c.l.b16 %v78
    %v87 = vunpack.c.l.b16 %v79
    %v88 = vunpack.c.l.b16 %v80
    %v89 = vpack.c.b16 %v86, %v85
    %v90 = vpack.c.b16 %v88, %v87
    %v94 = vsel %vm59, %v41, 0
    %96 = vmatpush.bf16.msra.mxu0 0
    %97 = vmatpush.bf16.msra.mxu0 0
    %98 = vmatpush.bf16.msra.mxu0 0
    %99 = vmatpush.bf16.msra.mxu0 0
    %100 = vmatpush.bf16.msra.mxu0 0
    %101 = vmatpush.bf16.msra.mxu0 0
    %102 = vmatpush.bf16.msra.mxu0 %v90
    %103 = vmatpush.bf16.msra.mxu0 %v89
    %104 = vmatmul.bf16.gmra.mxu0 %v94
    %v105 = vpop.f32.mrf.mxu0
    %v106 = vadd.f32 0.0, %v105
    %v107 = vpop.f32.mrf.mxu0
    %v108 = vadd.f32 0.0, %v107
    %109 = vdwg.mxu0
    %v110 = vld [vmem:[%s5] sm:$0xf]
    %v111 = vld [vmem:[%s5 + $0x4] sm:$0xf]
    %v112 = vld [vmem:[%s5 + $0x8] sm:$0xf]
    %v113 = vld [vmem:[%s5 + $0xc] sm:$0xf]
    %v118 = vunpack.c.l.b16 %v110
    %v119 = vunpack.c.l.b16 %v111
    %v120 = vunpack.c.l.b16 %v112
    %v121 = vunpack.c.l.b16 %v113
    %v122 = vpack.c.b16 %v119, %v118
    %v123 = vpack.c.b16 %v121, %v120
    %v127 = vsel %vm59, %v42, 0
    %129 = vmatpush.bf16.msra.mxu0 0
    %130 = vmatpush.bf16.msra.mxu0 0
    %131 = vmatpush.bf16.msra.mxu0 0
    %132 = vmatpush.bf16.msra.mxu0 0
    %133 = vmatpush.bf16.msra.mxu0 0
    %134 = vmatpush.bf16.msra.mxu0 0
    %135 = vmatpush.bf16.msra.mxu0 %v123
    %136 = vmatpush.bf16.msra.mxu0 %v122
    %137 = vmatmul.bf16.gmra.mxu0 %v127
    %v138 = vpop.f32.mrf.mxu0
    %v139 = vadd.f32 0.0, %v138
    %v140 = vpop.f32.mrf.mxu0
    %v141 = vadd.f32 0.0, %v140
    %142 = vdwg.mxu0
    %s143 = scalar_lea.vmem %s3, 16
    %v144 = vld [vmem:[%s143] sm:$0xf]
    %v145 = vld [vmem:[%s143 + $0x4] sm:$0xf]
    %v146 = vld [vmem:[%s143 + $0x8] sm:$0xf]
    %v147 = vld [vmem:[%s143 + $0xc] sm:$0xf]
    %v152 = vunpack.c.l.b16 %v144
    %v153 = vunpack.c.l.b16 %v145
    %v154 = vunpack.c.l.b16 %v146
    %v155 = vunpack.c.l.b16 %v147
    %v156 = vpack.c.b16 %v153, %v152
    %v157 = vpack.c.b16 %v155, %v154
    %160 = vmatpush.bf16.msra.mxu0 0
    %161 = vmatpush.bf16.msra.mxu0 0
    %162 = vmatpush.bf16.msra.mxu0 0
    %163 = vmatpush.bf16.msra.mxu0 0
    %164 = vmatpush.bf16.msra.mxu0 0
    %165 = vmatpush.bf16.msra.mxu0 0
    %166 = vmatpush.bf16.msra.mxu0 %v157
    %167 = vmatpush.bf16.msra.mxu0 %v156
    %168 = vmatmul.bf16.gmra.mxu0 %v61
    %v169 = vpop.f32.mrf.mxu0
    %v170 = vadd.f32 0.0, %v169
    %v171 = vpop.f32.mrf.mxu0
    %v172 = vadd.f32 0.0, %v171
    %173 = vdwg.mxu0
    %s174 = scalar_lea.vmem %s4, 16
    %v175 = vld [vmem:[%s174] sm:$0xf]
    %v176 = vld [vmem:[%s174 + $0x4] sm:$0xf]
    %v177 = vld [vmem:[%s174 + $0x8] sm:$0xf]
    %v178 = vld [vmem:[%s174 + $0xc] sm:$0xf]
    %v183 = vunpack.c.l.b16 %v175
    %v184 = vunpack.c.l.b16 %v176
    %v185 = vunpack.c.l.b16 %v177
    %v186 = vunpack.c.l.b16 %v178
    %v187 = vpack.c.b16 %v184, %v183
    %v188 = vpack.c.b16 %v186, %v185
    %191 = vmatpush.bf16.msra.mxu0 0
    %192 = vmatpush.bf16.msra.mxu0 0
    %193 = vmatpush.bf16.msra.mxu0 0
    %194 = vmatpush.bf16.msra.mxu0 0
    %195 = vmatpush.bf16.msra.mxu0 0
    %196 = vmatpush.bf16.msra.mxu0 0
    %197 = vmatpush.bf16.msra.mxu0 %v188
    %198 = vmatpush.bf16.msra.mxu0 %v187
    %199 = vmatmul.bf16.gmra.mxu0 %v94
    %v200 = vpop.f32.mrf.mxu0
    %v201 = vadd.f32 0.0, %v200
    %v202 = vpop.f32.mrf.mxu0
    %v203 = vadd.f32 0.0, %v202
    %204 = vdwg.mxu0
    %s205 = scalar_lea.vmem %s5, 16
    %v206 = vld [vmem:[%s205] sm:$0xf]
    %v207 = vld [vmem:[%s205 + $0x4] sm:$0xf]
    %v208 = vld [vmem:[%s205 + $0x8] sm:$0xf]
    %v209 = vld [vmem:[%s205 + $0xc] sm:$0xf]
    %v214 = vunpack.c.l.b16 %v206
    %v215 = vunpack.c.l.b16 %v207
    %v216 = vunpack.c.l.b16 %v208
    %v217 = vunpack.c.l.b16 %v209
    %v218 = vpack.c.b16 %v215, %v214
    %v219 = vpack.c.b16 %v217, %v216
    %222 = vmatpush.bf16.msra.mxu0 0
    %223 = vmatpush.bf16.msra.mxu0 0
    %224 = vmatpush.bf16.msra.mxu0 0
    %225 = vmatpush.bf16.msra.mxu0 0
    %226 = vmatpush.bf16.msra.mxu0 0
    %227 = vmatpush.bf16.msra.mxu0 0
    %228 = vmatpush.bf16.msra.mxu0 %v219
    %229 = vmatpush.bf16.msra.mxu0 %v218
    %230 = vmatmul.bf16.gmra.mxu0 %v127
    %v231 = vpop.f32.mrf.mxu0
    %v232 = vadd.f32 0.0, %v231
    %v233 = vpop.f32.mrf.mxu0
    %v234 = vadd.f32 0.0, %v233
    %235 = vdwg.mxu0
    %v236 = vpack.c.bf16 %v73, %v73
    %v237 = vpack.c.bf16 %v75, %v75
    %v238 = vpack.c.bf16 %v170, %v170
    %v239 = vpack.c.bf16 %v172, %v172
    %v240 = vpack.c.bf16 %v106, %v106
    %v241 = vpack.c.bf16 %v108, %v108
    %v242 = vpack.c.bf16 %v201, %v201
    %v243 = vpack.c.bf16 %v203, %v203
    %vm244 = vcmask 130048
    %v246 = vsel %vm244, %v236, 0
    %v249 = vsel %vm244, %v240, 0
    %251 = vmatpush.bf16.xpose.msra.mxu0 0
    %252 = vmatpush.bf16.xpose.msra.mxu0 0
    %253 = vmatpush.bf16.xpose.msra.mxu0 0
    %254 = vmatpush.bf16.xpose.msra.mxu0 0
    %255 = vmatpush.bf16.xpose.msra.mxu0 0
    %256 = vmatpush.bf16.xpose.msra.mxu0 0
    %257 = vmatpush.bf16.xpose.msra.mxu0 0
    %258 = vmatpush.bf16.xpose.msra.mxu0 %v249
    %259 = vmatmul.bf16.gmra.mxu0 %v246
    %v260 = vpop.f32.mrf.mxu0
    %v261 = vadd.f32 0.0, %v260
    %v262 = vpop.f32.mrf.mxu0
    %263 = vdwg.mxu0
    %v265 = vsel %vm244, %v237, 0
    %v268 = vsel %vm244, %v241, 0
    %270 = vmatpush.bf16.xpose.msra.mxu0 0
    %271 = vmatpush.bf16.xpose.msra.mxu0 0
    %272 = vmatpush.bf16.xpose.msra.mxu0 0
    %273 = vmatpush.bf16.xpose.msra.mxu0 0
    %274 = vmatpush.bf16.xpose.msra.mxu0 0
    %275 = vmatpush.bf16.xpose.msra.mxu0 0
    %276 = vmatpush.bf16.xpose.msra.mxu0 0
    %277 = vmatpush.bf16.xpose.msra.mxu0 %v268
    %278 = vmatmul.bf16.gmra.mxu0 %v265
    %v279 = vpop.f32.mrf.mxu0
    %v280 = vadd.f32 0.0, %v279
    %v281 = vpop.f32.mrf.mxu0
    %282 = vdwg.mxu0
    %v284 = vsel %vm244, %v238, 0
    %v287 = vsel %vm244, %v242, 0
    %289 = vmatpush.bf16.xpose.msra.mxu0 0
    %290 = vmatpush.bf16.xpose.msra.mxu0 0
    %291 = vmatpush.bf16.xpose.msra.mxu0 0
    %292 = vmatpush.bf16.xpose.msra.mxu0 0
    %293 = vmatpush.bf16.xpose.msra.mxu0 0
    %294 = vmatpush.bf16.xpose.msra.mxu0 0
    %295 = vmatpush.bf16.xpose.msra.mxu0 0
    %296 = vmatpush.bf16.xpose.msra.mxu0 %v287
    %297 = vmatmul.bf16.gmra.mxu0 %v284
    %v298 = vpop.f32.mrf.mxu0
    %v299 = vadd.f32 0.0, %v298
    %v300 = vpop.f32.mrf.mxu0
    %301 = vdwg.mxu0
    %v303 = vsel %vm244, %v239, 0
    %v306 = vsel %vm244, %v243, 0
    %308 = vmatpush.bf16.xpose.msra.mxu0 0
    %309 = vmatpush.bf16.xpose.msra.mxu0 0
    %310 = vmatpush.bf16.xpose.msra.mxu0 0
    %311 = vmatpush.bf16.xpose.msra.mxu0 0
    %312 = vmatpush.bf16.xpose.msra.mxu0 0
    %313 = vmatpush.bf16.xpose.msra.mxu0 0
    %314 = vmatpush.bf16.xpose.msra.mxu0 0
    %315 = vmatpush.bf16.xpose.msra.mxu0 %v306
    %316 = vmatmul.bf16.gmra.mxu0 %v303
    %v317 = vpop.f32.mrf.mxu0
    %v318 = vadd.f32 0.0, %v317
    %v319 = vpop.f32.mrf.mxu0
    %320 = vdwg.mxu0
    %vm321 = vcmask 64512
    %322 = vst.msk [vmem:[#allocation4] sm:$0xff] %vm321, %v261
    %323 = vst.msk [vmem:[#allocation4 + $0x8] sm:$0xff] %vm321, %v280
    %324 = vst.msk [vmem:[#allocation4 + $0x10] sm:$0xff] %vm321, %v299
    %325 = vst.msk [vmem:[#allocation4 + $0x18] sm:$0xff] %vm321, %v318
    %v326 = vmul.f32 %v261, 0.25
    %v327 = vmul.f32 %v280, 0.25
    %v328 = vmul.f32 %v299, 0.25
    %v329 = vmul.f32 %v318, 0.25
    %v330 = vsel %vm321, %v326, -inf
    %331 = vmax.xlane.f32.xlu0 %v330
    %v332 = vpop.xlane.xlu0 %331
    %v333 = vsel %vm321, %v327, -inf
    %334 = vmax.xlane.f32.xlu0 %v333
    %v335 = vpop.xlane.xlu0 %334
    %v336 = vsel %vm321, %v328, -inf
    %337 = vmax.xlane.f32.xlu0 %v336
    %v338 = vpop.xlane.xlu0 %337
    %v339 = vsel %vm321, %v329, -inf
    %340 = vmax.xlane.f32.xlu0 %v339
    %v341 = vpop.xlane.xlu0 %340
    %v342 = vsub.f32 %v326, %v332
    %v343 = vsub.f32 %v327, %v335
    %v344 = vsub.f32 %v328, %v338
    %v345 = vsub.f32 %v329, %v341
    %v346 = vmul.f32 %v342, 1.442695
    %v347 = vpow.pop %v346
    %v348 = vmul.f32 %v343, 1.442695
    %v349 = vpow.pop %v348
    %v350 = vmul.f32 %v344, 1.442695
    %v351 = vpow.pop %v350
    %v352 = vmul.f32 %v345, 1.442695
    %v353 = vpow.pop %v352
    %v354 = vsel %vm321, %v347, 0.0
    %355 = vadd.xlane.f32.xlu0 %v354
    %v356 = vpop.xlane.xlu0 %355
    %v357 = vsel %vm321, %v349, 0.0
    %358 = vadd.xlane.f32.xlu0 %v357
    %v359 = vpop.xlane.xlu0 %358
    %v360 = vsel %vm321, %v351, 0.0
    %361 = vadd.xlane.f32.xlu0 %v360
    %v362 = vpop.xlane.xlu0 %361
    %v363 = vsel %vm321, %v353, 0.0
    %364 = vadd.xlane.f32.xlu0 %v363
    %v365 = vpop.xlane.xlu0 %364
    %v366 = vrcp.pop %v356
    %v367 = vmul.f32 %v356, %v366
    %v368 = vsub.f32 1.0, %v367
    %v369 = vmul.f32 %v366, %v368
    %v370 = vadd.f32 %v366, %v369
    %vm371 = vweird.f32 %v356
    %vm372 = vweird.f32 %v366
    %vm373 = vmor %vm371, %vm372
    %v374 = vsel %vm373, %v366, %v370
    %v375 = vand.u32 2147483647, %v356
    %vm376 = vcmp.eq.f32.partialorder %v375, 8.507059e+37
    %v377 = vand.u32 %v356, 2147483648
    %v378 = vor.u32 1.1754944e-38, %v377
    %v379 = vsel %vm376, %v378, %v374
    %v380 = vrcp.pop %v359
    %v381 = vmul.f32 %v359, %v380
    %v382 = vsub.f32 1.0, %v381
    %v383 = vmul.f32 %v380, %v382
    %v384 = vadd.f32 %v380, %v383
    %vm385 = vweird.f32 %v359
    %vm386 = vweird.f32 %v380
    %vm387 = vmor %vm385, %vm386
    %v388 = vsel %vm387, %v380, %v384
    %v389 = vand.u32 2147483647, %v359
    %vm390 = vcmp.eq.f32.partialorder %v389, 8.507059e+37
    %v391 = vand.u32 %v359, 2147483648
    %v392 = vor.u32 1.1754944e-38, %v391
    %v393 = vsel %vm390, %v392, %v388
    %v394 = vrcp.pop %v362
    %v395 = vmul.f32 %v362, %v394
    %v396 = vsub.f32 1.0, %v395
    %v397 = vmul.f32 %v394, %v396
    %v398 = vadd.f32 %v394, %v397
    %vm399 = vweird.f32 %v362
    %vm400 = vweird.f32 %v394
    %vm401 = vmor %vm399, %vm400
    %v402 = vsel %vm401, %v394, %v398
    %v403 = vand.u32 2147483647, %v362
    %vm404 = vcmp.eq.f32.partialorder %v403, 8.507059e+37
    %v405 = vand.u32 %v362, 2147483648
    %v406 = vor.u32 1.1754944e-38, %v405
    %v407 = vsel %vm404, %v406, %v402
    %v408 = vrcp.pop %v365
    %v409 = vmul.f32 %v365, %v408
    %v410 = vsub.f32 1.0, %v409
    %v411 = vmul.f32 %v408, %v410
    %v412 = vadd.f32 %v408, %v411
    %vm413 = vweird.f32 %v365
    %vm414 = vweird.f32 %v408
    %vm415 = vmor %vm413, %vm414
    %v416 = vsel %vm415, %v408, %v412
    %v417 = vand.u32 2147483647, %v365
    %vm418 = vcmp.eq.f32.partialorder %v417, 8.507059e+37
    %v419 = vand.u32 %v365, 2147483648
    %v420 = vor.u32 1.1754944e-38, %v419
    %v421 = vsel %vm418, %v420, %v416
    %v422 = vmul.f32 %v347, %v379
    %v423 = vmul.f32 %v349, %v393
    %v424 = vmul.f32 %v351, %v407
    %v425 = vmul.f32 %v353, %v421
    %v426 = vpack.c.bf16 %v422, %v422
    %v427 = vpack.c.bf16 %v423, %v423
    %v428 = vpack.c.bf16 %v424, %v424
    %v429 = vpack.c.bf16 %v425, %v425
    %v430 = vpack.c.bf16 %v139, %v139
    %v431 = vpack.c.bf16 %v141, %v141
    %v432 = vpack.c.bf16 %v232, %v232
    %v433 = vpack.c.bf16 %v234, %v234
    %v435 = vsel %vm321, %v426, 0
    %vm437 = vcmask 1043456
    %v439 = vsel %vm437, %v430, 0
    %441 = vmatpush.bf16.msra.mxu0 0
    %442 = vmatpush.bf16.msra.mxu0 0
    %443 = vmatpush.bf16.msra.mxu0 0
    %444 = vmatpush.bf16.msra.mxu0 0
    %445 = vmatpush.bf16.msra.mxu0 0
    %446 = vmatpush.bf16.msra.mxu0 0
    %447 = vmatpush.bf16.msra.mxu0 0
    %448 = vmatpush.bf16.msra.mxu0 %v439
    %449 = vmatmul.bf16.gmra.mxu0 %v435
    %v450 = vpop.f32.mrf.mxu0
    %v451 = vadd.f32 0.0, %v450
    %v452 = vpop.f32.mrf.mxu0
    %453 = vdwg.mxu0
    %v455 = vsel %vm321, %v427, 0
    %v458 = vsel %vm437, %v431, 0
    %460 = vmatpush.bf16.msra.mxu0 0
    %461 = vmatpush.bf16.msra.mxu0 0
    %462 = vmatpush.bf16.msra.mxu0 0
    %463 = vmatpush.bf16.msra.mxu0 0
    %464 = vmatpush.bf16.msra.mxu0 0
    %465 = vmatpush.bf16.msra.mxu0 0
    %466 = vmatpush.bf16.msra.mxu0 0
    %467 = vmatpush.bf16.msra.mxu0 %v458
    %468 = vmatmul.bf16.gmra.mxu0 %v455
    %v469 = vpop.f32.mrf.mxu0
    %v470 = vadd.f32 0.0, %v469
    %v471 = vpop.f32.mrf.mxu0
    %472 = vdwg.mxu0
    %v474 = vsel %vm321, %v428, 0
    %v477 = vsel %vm437, %v432, 0
    %479 = vmatpush.bf16.msra.mxu0 0
    %480 = vmatpush.bf16.msra.mxu0 0
    %481 = vmatpush.bf16.msra.mxu0 0
    %482 = vmatpush.bf16.msra.mxu0 0
    %483 = vmatpush.bf16.msra.mxu0 0
    %484 = vmatpush.bf16.msra.mxu0 0
    %485 = vmatpush.bf16.msra.mxu0 0
    %486 = vmatpush.bf16.msra.mxu0 %v477
    %487 = vmatmul.bf16.gmra.mxu0 %v474
    %v488 = vpop.f32.mrf.mxu0
    %v489 = vadd.f32 0.0, %v488
    %v490 = vpop.f32.mrf.mxu0
    %491 = vdwg.mxu0
    %v493 = vsel %vm321, %v429, 0
    %v496 = vsel %vm437, %v433, 0
    %498 = vmatpush.bf16.msra.mxu0 0
    %499 = vmatpush.bf16.msra.mxu0 0
    %500 = vmatpush.bf16.msra.mxu0 0
    %501 = vmatpush.bf16.msra.mxu0 0
    %502 = vmatpush.bf16.msra.mxu0 0
    %503 = vmatpush.bf16.msra.mxu0 0
    %504 = vmatpush.bf16.msra.mxu0 0
    %505 = vmatpush.bf16.msra.mxu0 %v496
    %506 = vmatmul.bf16.gmra.mxu0 %v493
    %v507 = vpop.f32.mrf.mxu0
    %v508 = vadd.f32 0.0, %v507
    %v509 = vpop.f32.mrf.mxu0
    %510 = vdwg.mxu0
    %v511 = vld [vmem:[%s7] sm:$0x1]
    %v512 = vperm.slane %v511, 0
    %v513 = vadd.f32 %v34, %v512
    %v514 = vadd.f32 %v35, %v512
    %v515 = vpack.c.bf16 %v470, %v451
    %v516 = vld [vmem:[%s6] sm:$0xf]
    %v517 = vld [vmem:[%s6 + $0x4] sm:$0xf]
    %v520 = vunpack.c.l.b16 %v516
    %v521 = vunpack.c.l.b16 %v517
    %v522 = vpack.c.b16 %v521, %v520
    %v525 = vsel %vm244, %v515, 0
    %527 = vmatpush.bf16.msra.mxu0 0
    %528 = vmatpush.bf16.msra.mxu0 0
    %529 = vmatpush.bf16.msra.mxu0 0
    %530 = vmatpush.bf16.msra.mxu0 0
    %531 = vmatpush.bf16.msra.mxu0 0
    %532 = vmatpush.bf16.msra.mxu0 0
    %533 = vmatpush.bf16.msra.mxu0 0
    %534 = vmatpush.bf16.msra.mxu0 %v522
    %535 = vmatmul.bf16.gmra.mxu0 %v525
    %v536 = vpop.f32.mrf.mxu0
    %v537 = vadd.f32 0.0, %v536
    %v538 = vpop.f32.mrf.mxu0
    %v539 = vadd.f32 0.0, %v538
    %540 = vdwg.mxu0
    %v541 = vadd.f32 %v513, %v537
    %v542 = vadd.f32 %v514, %v539
    %v543 = vpack.c.bf16 %v508, %v489
    %s544 = scalar_lea.vmem %s6, 8
    %v545 = vld [vmem:[%s544] sm:$0xf]
    %v546 = vld [vmem:[%s544 + $0x4] sm:$0xf]
    %v549 = vunpack.c.l.b16 %v545
    %v550 = vunpack.c.l.b16 %v546
    %v551 = vpack.c.b16 %v550, %v549
    %v554 = vsel %vm244, %v543, 0
    %556 = vmatpush.bf16.msra.mxu0 0
    %557 = vmatpush.bf16.msra.mxu0 0
    %558 = vmatpush.bf16.msra.mxu0 0
    %559 = vmatpush.bf16.msra.mxu0 0
    %560 = vmatpush.bf16.msra.mxu0 0
    %561 = vmatpush.bf16.msra.mxu0 0
    %562 = vmatpush.bf16.msra.mxu0 0
    %563 = vmatpush.bf16.msra.mxu0 %v551
    %564 = vmatmul.bf16.gmra.mxu0 %v554
    %v565 = vpop.f32.mrf.mxu0
    %v566 = vadd.f32 0.0, %v565
    %v567 = vpop.f32.mrf.mxu0
    %v568 = vadd.f32 0.0, %v567
    %569 = vdwg.mxu0
    %v570 = vadd.f32 %v541, %v566
    %v571 = vadd.f32 %v542, %v568
    %v572 = vsel %vm59, %v570, 0.0
    %573 = vadd.xlane.f32.xlu0 %v572
    %v574 = vpop.xlane.xlu0 %573
    %v575 = vsel %vm59, %v571, 0.0
    %576 = vadd.xlane.f32.xlu0 %v575
    %v577 = vpop.xlane.xlu0 %576
    %v578 = vrcp.pop 32.0
    %v579 = vmul.f32 32.0, %v578
    %v580 = vsub.f32 1.0, %v579
    %v581 = vmul.f32 %v578, %v580
    %v582 = vadd.f32 %v578, %v581
    %vm583 = vweird.f32 %v578
    %v584 = vsel %vm583, %v578, %v582
    %v585 = vmul.f32 %v574, %v584
    %v586 = vmul.f32 %v577, %v584
    %v587 = vsub.f32 %v570, %v585
    %v588 = vsub.f32 %v571, %v586
    %v589 = vmul.f32 %v587, %v587
    %v590 = vmul.f32 %v588, %v588
    %v591 = vsel %vm59, %v589, 0.0
    %592 = vadd.xlane.f32.xlu0 %v591
    %v593 = vpop.xlane.xlu0 %592
    %v594 = vsel %vm59, %v590, 0.0
    %595 = vadd.xlane.f32.xlu0 %v594
    %v596 = vpop.xlane.xlu0 %595
    %v597 = vmul.f32 %v593, %v584
    %v598 = vmul.f32 %v596, %v584
    %v599 = vadd.f32 %v597, 1e-05
    %v600 = vadd.f32 %v598, 1e-05
    %v601 = vrsqrt.pop %v599
    %v602 = vmul.f32 %v601, %v599
    %v603 = vmul.f32 %v602, %v601
    %v604 = vmul.f32 0.5, %v603
    %v605 = vsub.f32 1.5, %v604
    %v606 = vmul.f32 %v601, %v605
    %vm607 = vweird.f32 %v599
    %vm608 = vweird.f32 %v601
    %vm609 = vmor %vm607, %vm608
    %v610 = vsel %vm609, %v601, %v606
    %v611 = vrsqrt.pop %v600
    %v612 = vmul.f32 %v611, %v600
    %v613 = vmul.f32 %v612, %v611
    %v614 = vmul.f32 0.5, %v613
    %v615 = vsub.f32 1.5, %v614
    %v616 = vmul.f32 %v611, %v615
    %vm617 = vweird.f32 %v600
    %vm618 = vweird.f32 %v611
    %vm619 = vmor %vm617, %vm618
    %v620 = vsel %vm619, %v611, %v616
    %v621 = vmul.f32 %v587, %v610
    %v622 = vmul.f32 %v588, %v620
    %v623 = vld [vmem:[%s7 + $0x1] sm:$0x1]
    %v624 = vperm.slane %v623, 0
    %v625 = vmul.f32 %v621, %v624
    %v626 = vmul.f32 %v622, %v624
    %v627 = vld [vmem:[%s7 + $0x2] sm:$0x1]
    %v628 = vperm.slane %v627, 0
    %v629 = vadd.f32 %v625, %v628
    %v630 = vadd.f32 %v626, %v628
    %631 = vst.msk [vmem:[#allocation2] sm:$0xff] %vm59, %v629
    %632 = vst.msk [vmem:[#allocation2 + $0x8] sm:$0xff] %vm59, %v630
    // Predicated region
    $region34: #{tpu_custom_call.1} parent=1 // pred_check
      _
    $region35: #{tpu_custom_call.1} parent=1 // pred_check_branch
      %634 = sbr.rel (0) target = $region37
    $region36: #{tpu_custom_call.1} parent=1 // pred_region
      %636 = vsyncadd [#allocation3], 0
      %s637 = sshll.u32 [#allocation2], 4
      %s638 = int_to_ptr.vmem [resolvable:$true] %s637
      %s639 = sshll.u32 %s8, 4
      %s640 = int_to_ptr.hbm [resolvable:$true] %s639
      %645 = dma.vmem_to_hbm [thread:$0]  %s638, 256, %s640, [#allocation3], 128, 128, 8
    $region37: #{tpu_custom_call.1} parent=1 // pred_fallthru
      _
    // Predicated region
    $region38: #{tpu_custom_call.1} parent=1 // pred_check
      _
    $region39: #{tpu_custom_call.1} parent=1 // pred_check_branch
      %647 = sbr.rel (0) target = $region41
    $region40: #{tpu_custom_call.1} parent=1 // pred_region
      %649 = vsyncadd [#allocation5], 0
      %s650 = sshll.u32 [#allocation4], 4
      %s651 = int_to_ptr.vmem [resolvable:$true] %s650
      %s652 = sshll.u32 %s9, 4
      %s653 = int_to_ptr.hbm [resolvable:$true] %s652
      %658 = dma.vmem_to_hbm [thread:$0]  %s651, 512, %s653, [#allocation5], 128, 128, 8
    $region41: #{tpu_custom_call.1} parent=1 // pred_fallthru
      _
    // Predicated region
    $region42: #{tpu_custom_call.1} parent=1 // pred_check
      _
    $region43: #{tpu_custom_call.1} parent=1 // pred_check_branch
      %660 = sbr.rel (0) target = $region45
    $region44: #{tpu_custom_call.1} parent=1 // pred_region
      %662 = dma.done [#allocation3], 256
    $region45: #{tpu_custom_call.1} parent=1 // pred_fallthru
      _
    // Predicated region
    $region46: #{tpu_custom_call.1} parent=1 // pred_check
      _
    $region47: #{tpu_custom_call.1} parent=1 // pred_check_branch
      %664 = sbr.rel (0) target = $region49
    $region48: #{tpu_custom_call.1} parent=1 // pred_region
      %666 = dma.done [#allocation5], 512
    $region49: #{tpu_custom_call.1} parent=1 // pred_fallthru
      _
    %667 = vsyncpa [#allocation3], 1
    %668 = vsyncpa [#allocation5], 1

</llo_original>
